<compile_context>
chip_gen: v7x
topology: tpu7x:2x2x1
jax: 0.10.0
libtpu: 0.0.40
codegen_flags: <defaults>
</compile_context>

<pallas_src>
import functools

import jax
import jax.numpy as jnp
from jax import lax
from jax.experimental import pallas as pl
from jax.experimental.pallas import tpu as pltpu

C_IN = 20
C_OUT = 256
H = W = 8
KH = KW = 3
K_IM2COL = C_IN * KH * KW  # 180
EPS = 1e-5

_VMEM_LIMIT = 32 * 1024 * 1024  # explicit, safe on v5e / v6e / v7x


def _stats_kernel(p_ref, w_ref, stats_ref, *, bm, m):
    # p_ref: (bm, 180) bf16, w_ref: (180, 256) bf16
    y = jnp.dot(p_ref[...], w_ref[...], preferred_element_type=jnp.float32)
    if m % bm != 0:
        # Last tile is partial: rows >= m hold unspecified data from the clipped
        # input DMA.  Zero them so the BN statistics stay exact.
        base = pl.program_id(0) * bm
        rows = lax.broadcasted_iota(jnp.int32, (bm, 1), 0) + base
        y = jnp.where(rows < m, y, 0.0)
    s = jnp.sum(y, axis=0, keepdims=True)        # (1, 256) f32
    ss = jnp.sum(y * y, axis=0, keepdims=True)   # (1, 256) f32
    packed = jnp.concatenate([s, ss], axis=1)    # (1, 512): sum | sumsq
    # 8-row broadcast keeps the store (8,128)-aligned; row 0 is consumed.
    stats_ref[...] = jnp.broadcast_to(packed, (8, 2 * C_OUT))


def _apply_kernel(p_ref, w_ref, scale_ref, shift_ref, o_ref):
    # Recompute the matmul tile, then one fused affine + ReLU pass over y.
    # Accumulation and the BN affine stay f32; only the final store is o_dtype.
    y = jnp.dot(p_ref[...], w_ref[...], preferred_element_type=jnp.float32)
    o_ref[...] = jnp.maximum(y * scale_ref[...] + shift_ref[...],
                             0.0).astype(o_ref.dtype)


def _im2col_bf16(x):
    # x: (N, C_IN, 8, 8) f32 -> (N*64, 180) bf16, patch ordering (c, kh, kw)
    # minor.  Cast to bf16 FIRST so all im2col intermediates are half-width.
    n = x.shape[0]
    xb = x.astype(jnp.bfloat16)
    xp = jnp.pad(xb, ((0, 0), (0, 0), (1, 1), (1, 1)))
    taps = [xp[:, :, kh:kh + H, kw:kw + W] for kh in range(KH) for kw in range(KW)]
    patches = jnp.stack(taps, axis=-1).transpose(0, 2, 3, 1, 4)  # (N, H, W, C, 9)
    return patches.reshape(n * H * W, K_IM2COL)


def conv_block_forward(s, conv_w, conv_b, bn_gamma, bn_beta, *,
                       block_m=2048, channels_last=True,
                       out_dtype=jnp.bfloat16):
    """Forward pass of ConvBlock.  `s` is reshaped to (-1, 20, 8, 8) like the
    PyTorch `.view`.

    Default (hot path): lane-dense (N, 8, 8, 256) NHWC slab in bf16.
    channels_last=False / out_dtype=jnp.float32 give the module-faithful
    (N, 256, 8, 8) f32 layout (the NHWC->NCHW transpose is an extra XLA pass).

    `conv_b` is accepted for API fidelity but unused: training-mode BN subtracts
    the batch mean, so the conv bias cancels exactly."""
    del conv_b
    assert block_m % 64 == 0 and block_m >= 64
    x = s.reshape(-1, C_IN, H, W).astype(jnp.float32)
    n = x.shape[0]
    m = n * H * W  # always a multiple of 64

    patches = _im2col_bf16(x)                                      # (m, 180) bf16
    w2d = conv_w.reshape(C_OUT, K_IM2COL).T.astype(jnp.bfloat16)   # (180, 256) bf16

    # Tile size: multiple of 64, capped by block_m, and kept <= m/2 whenever
    # m allows so the "parallel" grid has >= 2 steps (v7x megacore engages).
    bm = min(block_m, m)
    if m >= 128:
        bm = min(bm, (m // 2) // 64 * 64)
    bm = max(bm, 64)
    grid_m = pl.cdiv(m, bm)

    params = pltpu.CompilerParams(dimension_semantics=("parallel",),
                                  vmem_limit_bytes=_VMEM_LIMIT)

    # Pass 1: per-tile partial per-channel sum / sum-of-squares of y,
    # packed into a single (8, 512) block per tile.
    stats = pl.pallas_call(
        functools.partial(_stats_kernel, bm=bm, m=m),
        out_shape=jax.ShapeDtypeStruct((grid_m * 8, 2 * C_OUT), jnp.float32),
        grid_spec=pl.GridSpec(
            grid=(grid_m,),
            in_specs=[pl.BlockSpec((bm, K_IM2COL), lambda i: (i, 0)),
                      pl.BlockSpec((K_IM2COL, C_OUT), lambda i: (0, 0))],
            out_specs=pl.BlockSpec((8, 2 * C_OUT), lambda i: (i, 0))),
        compiler_params=params,
    )(patches, w2d)

    # Combine partials (tiny) and fold BN into one affine: scale / shift.
    part = stats.reshape(grid_m, 8, 2 * C_OUT)[:, 0, :]
    sum_y = jnp.sum(part[:, :C_OUT], axis=0)
    sum_sq = jnp.sum(part[:, C_OUT:], axis=0)
    inv_m = 1.0 / float(m)
    mean = sum_y * inv_m
    var = jnp.maximum(sum_sq * inv_m - mean * mean, 0.0)  # biased batch variance
    scale = bn_gamma.astype(jnp.float32) * lax.rsqrt(var + EPS)
    shift = bn_beta.astype(jnp.float32) - mean * scale

    # Pass 2: recompute the matmul tile, apply fused scale/shift + ReLU, store
    # in out_dtype (bf16 default).  Partial last output block is clipped by
    # Pallas, so no padding of patches is needed.
    out_flat = pl.pallas_call(
        _apply_kernel,
        out_shape=jax.ShapeDtypeStruct((m, C_OUT), out_dtype),
        grid_spec=pl.GridSpec(
            grid=(grid_m,),
            in_specs=[pl.BlockSpec((bm, K_IM2COL), lambda i: (i, 0)),
                      pl.BlockSpec((K_IM2COL, C_OUT), lambda i: (0, 0)),
                      pl.BlockSpec((1, C_OUT), lambda i: (0, 0)),
                      pl.BlockSpec((1, C_OUT), lambda i: (0, 0))],
            out_specs=pl.BlockSpec((bm, C_OUT), lambda i: (i, 0))),
        compiler_params=params,
    )(patches, w2d, scale.reshape(1, C_OUT), shift.reshape(1, C_OUT))

    out_nhwc = out_flat.reshape(n, H, W, C_OUT)
    if channels_last:
        return out_nhwc                        # lane-dense layout, no transpose
    return out_nhwc.transpose(0, 3, 1, 2)      # module-faithful NCHW (off hot path)


def _reference(s, conv_w, conv_b, bn_gamma, bn_beta):
    # Pure-f32 reference with the exact PyTorch semantics (including the bias).
    x = s.reshape(-1, C_IN, H, W).astype(jnp.float32)
    y = lax.conv_general_dilated(
        x, conv_w.astype(jnp.float32),
        window_strides=(1, 1), padding=((1, 1), (1, 1)),
        dimension_numbers=("NCHW", "OIHW", "NCHW"))
    y = y + conv_b.reshape(1, C_OUT, 1, 1)
    mean = jnp.mean(y, axis=(0, 2, 3), keepdims=True)
    var = jnp.mean(jnp.square(y - mean), axis=(0, 2, 3), keepdims=True)
    y = (y - mean) * lax.rsqrt(var + EPS)
    y = y * bn_gamma.reshape(1, C_OUT, 1, 1) + bn_beta.reshape(1, C_OUT, 1, 1)
    return jnp.maximum(y, 0.0)


if __name__ == "__main__":
    key = jax.random.PRNGKey(0)
    k_x, k_x2, k_w, k_b, k_g, k_be = jax.random.split(key, 6)

    # Deterministic synthetic parameters (module __init__ shapes).
    conv_w = 0.05 * jax.random.normal(k_w, (C_OUT, C_IN, KH, KW), dtype=jnp.float32)
    conv_b = 0.05 * jax.random.normal(k_b, (C_OUT,), dtype=jnp.float32)
    bn_gamma = 1.0 + 0.01 * jax.random.normal(k_g, (C_OUT,), dtype=jnp.float32)
    bn_beta = 0.01 * jax.random.normal(k_be, (C_OUT,), dtype=jnp.float32)

    # --- Hot path: batch=2 boards of (20, 8, 8), bf16 NHWC output. ---
    x = jax.random.normal(k_x, (2, C_IN, H, W), dtype=jnp.float32)
    fwd = jax.jit(lambda *a: conv_block_forward(*a))  # defaults: NHWC, bf16
    out = jax.block_until_ready(fwd(x, conv_w, conv_b, bn_gamma, bn_beta))
    assert out.shape == (2, H, W, C_OUT)

    ref = jax.block_until_ready(_reference(x, conv_w, conv_b, bn_gamma, bn_beta))
    ref_nhwc = ref.transpose(0, 2, 3, 1)
    out_f32 = out.astype(jnp.float32)
    max_err = float(jnp.max(jnp.abs(out_f32 - ref_nhwc)))
    # bf16 matmul inputs + bf16 output store; f32 accumulation / BN math.
    assert jnp.allclose(out_f32, ref_nhwc, atol=3e-2, rtol=3e-2), (
        f"NHWC/bf16 mismatch vs reference, max abs err = {max_err}")

    # --- Module-faithful path: batch=5 (exercises the masked partial tile),
    #     f32 NCHW output. ---
    x2 = jax.random.normal(k_x2, (5, C_IN, H, W), dtype=jnp.float32)
    fwd_nchw = jax.jit(lambda *a: conv_block_forward(
        *a, channels_last=False, out_dtype=jnp.float32, block_m=128))
    out2 = jax.block_until_ready(fwd_nchw(x2, conv_w, conv_b, bn_gamma, bn_beta))
    assert out2.shape == (5, C_OUT, H, W)

    ref2 = jax.block_until_ready(_reference(x2, conv_w, conv_b, bn_gamma, bn_beta))
    max_err2 = float(jnp.max(jnp.abs(out2 - ref2)))
    assert jnp.allclose(out2, ref2, atol=3e-2, rtol=3e-2), (
        f"NCHW/f32 mismatch vs reference, max abs err = {max_err2}")

    print("KERNEL_OK")
</pallas_src>

<mosaic_0001>
module attributes {stable_mosaic.version = 11 : i64} {
  func.func @_stats_kernel(%arg0: i32, %arg1: memref<64x180xbf16, #tpu.memory_space<vmem>>, %arg2: memref<180x256xbf16, #tpu.memory_space<vmem>>, %arg3: memref<8x512xf32, #tpu.memory_space<vmem>>) attributes {dimension_semantics = [#tpu.dimension_semantics<parallel>], iteration_bounds = array<i64: 2>, scalar_prefetch = 0 : i64, scratch_operands = 0 : i64, tpu.core_type = #tpu.core_type<tc>, window_params = [{transform_indices = @transform_0, window_bounds = array<i64: 64, 180>}, {pipeline_mode = #tpu.pipeline_mode<synchronous>, transform_indices = @transform_1, window_bounds = array<i64: 180, 256>}, {transform_indices = @transform_2, window_bounds = array<i64: 8, 512>}]} {
    %c0 = arith.constant 0 : index
    %c0_0 = arith.constant 0 : index
    %0 = vector.load %arg1[%c0, %c0_0] : memref<64x180xbf16, #tpu.memory_space<vmem>>, vector<64x180xbf16>
    %c0_1 = arith.constant 0 : index
    %c0_2 = arith.constant 0 : index
    %1 = vector.load %arg2[%c0_1, %c0_2] : memref<180x256xbf16, #tpu.memory_space<vmem>>, vector<180x256xbf16>
    %cst = arith.constant dense<0.000000e+00> : vector<64x256xf32>
    %2 = tpu.matmul %0, %1, %cst {dimension_numbers = #tpu.dot_dimension_numbers<[1], [0], [0], [1], [0, 0, 1, 1], [], []>} : vector<64x180xbf16>, vector<180x256xbf16>, vector<64x256xf32> -> vector<64x256xf32>
    %cst_3 = arith.constant dense<0.000000e+00> : vector<256xf32>
    %3 = vector.multi_reduction <add>, %2, %cst_3 [0] : vector<64x256xf32> to vector<256xf32>
    %4 = vector.shape_cast %3 : vector<256xf32> to vector<1x256xf32>
    %5 = arith.mulf %2, %2 : vector<64x256xf32>
    %cst_4 = arith.constant dense<0.000000e+00> : vector<256xf32>
    %6 = vector.multi_reduction <add>, %5, %cst_4 [0] : vector<64x256xf32> to vector<256xf32>
    %7 = vector.shape_cast %6 : vector<256xf32> to vector<1x256xf32>
    %8 = tpu.concatenate %4, %7 in 1 : vector<1x256xf32>, vector<1x256xf32> -> vector<1x512xf32>
    %9 = vector.shape_cast %8 : vector<1x512xf32> to vector<1x512xf32>
    %10 = vector.broadcast %9 : vector<1x512xf32> to vector<8x512xf32>
    %c0_5 = arith.constant 0 : index
    %c0_6 = arith.constant 0 : index
    %11 = vector.load %arg3[%c0_5, %c0_6] : memref<8x512xf32, #tpu.memory_space<vmem>>, vector<8x512xf32>
    tpu.vector_store %arg3[%c0_5, %c0_6], %10 {strides = array<i32>} : memref<8x512xf32, #tpu.memory_space<vmem>>, vector<8x512xf32>,
    return
  }
  func.func @transform_0(%arg0: i32) -> (i32, i32) {
    %c0_i32 = arith.constant 0 : i32
    %c0_i32_0 = arith.constant 0 : i32
    return %arg0, %c0_i32 : i32, i32
  }
  func.func @transform_1(%arg0: i32) -> (i32, i32) {
    %c0_i32 = arith.constant 0 : i32
    %c0_i32_0 = arith.constant 0 : i32
    %c0_i32_1 = arith.constant 0 : i32
    return %c0_i32, %c0_i32_0 : i32, i32
  }
  func.func @transform_2(%arg0: i32) -> (i32, i32) {
    %c0_i32 = arith.constant 0 : i32
    %c0_i32_0 = arith.constant 0 : i32
    return %arg0, %c0_i32 : i32, i32
  }
}

module attributes {stable_mosaic.version = 11 : i64} {
  func.func @_apply_kernel(%arg0: i32, %arg1: memref<64x180xbf16, #tpu.memory_space<vmem>>, %arg2: memref<180x256xbf16, #tpu.memory_space<vmem>>, %arg3: memref<1x256xf32, #tpu.memory_space<vmem>>, %arg4: memref<1x256xf32, #tpu.memory_space<vmem>>, %arg5: memref<64x256xbf16, #tpu.memory_space<vmem>>) attributes {dimension_semantics = [#tpu.dimension_semantics<parallel>], iteration_bounds = array<i64: 2>, scalar_prefetch = 0 : i64, scratch_operands = 0 : i64, tpu.core_type = #tpu.core_type<tc>, window_params = [{transform_indices = @transform_0, window_bounds = array<i64: 64, 180>}, {pipeline_mode = #tpu.pipeline_mode<synchronous>, transform_indices = @transform_1, window_bounds = array<i64: 180, 256>}, {pipeline_mode = #tpu.pipeline_mode<synchronous>, transform_indices = @transform_2, window_bounds = array<i64: 1, 256>}, {pipeline_mode = #tpu.pipeline_mode<synchronous>, transform_indices = @transform_3, window_bounds = array<i64: 1, 256>}, {transform_indices = @transform_4, window_bounds = array<i64: 64, 256>}]} {
    %c0 = arith.constant 0 : index
    %c0_0 = arith.constant 0 : index
    %0 = vector.load %arg1[%c0, %c0_0] : memref<64x180xbf16, #tpu.memory_space<vmem>>, vector<64x180xbf16>
    %c0_1 = arith.constant 0 : index
    %c0_2 = arith.constant 0 : index
    %1 = vector.load %arg2[%c0_1, %c0_2] : memref<180x256xbf16, #tpu.memory_space<vmem>>, vector<180x256xbf16>
    %cst = arith.constant dense<0.000000e+00> : vector<64x256xf32>
    %2 = tpu.matmul %0, %1, %cst {dimension_numbers = #tpu.dot_dimension_numbers<[1], [0], [0], [1], [0, 0, 1, 1], [], []>} : vector<64x180xbf16>, vector<180x256xbf16>, vector<64x256xf32> -> vector<64x256xf32>
    %c0_3 = arith.constant 0 : index
    %c0_4 = arith.constant 0 : index
    %3 = vector.load %arg3[%c0_3, %c0_4] : memref<1x256xf32, #tpu.memory_space<vmem>>, vector<1x256xf32>
    %4 = vector.broadcast %3 : vector<1x256xf32> to vector<64x256xf32>
    %5 = arith.mulf %2, %4 : vector<64x256xf32>
    %c0_5 = arith.constant 0 : index
    %c0_6 = arith.constant 0 : index
    %6 = vector.load %arg4[%c0_5, %c0_6] : memref<1x256xf32, #tpu.memory_space<vmem>>, vector<1x256xf32>
    %7 = vector.broadcast %6 : vector<1x256xf32> to vector<64x256xf32>
    %8 = arith.addf %5, %7 : vector<64x256xf32>
    %cst_7 = arith.constant 0.000000e+00 : f32
    %9 = vector.broadcast %cst_7 : f32 to vector<64x256xf32>
    %10 = arith.maximumf %8, %9 : vector<64x256xf32>
    %11 = arith.truncf %10 : vector<64x256xf32> to vector<64x256xbf16>
    %c0_8 = arith.constant 0 : index
    %c0_9 = arith.constant 0 : index
    %12 = vector.load %arg5[%c0_8, %c0_9] : memref<64x256xbf16, #tpu.memory_space<vmem>>, vector<64x256xbf16>
    tpu.vector_store %arg5[%c0_8, %c0_9], %11 {strides = array<i32>} : memref<64x256xbf16, #tpu.memory_space<vmem>>, vector<64x256xbf16>,
    return
  }
  func.func @transform_0(%arg0: i32) -> (i32, i32) {
    %c0_i32 = arith.constant 0 : i32
    %c0_i32_0 = arith.constant 0 : i32
    return %arg0, %c0_i32 : i32, i32
  }
  func.func @transform_1(%arg0: i32) -> (i32, i32) {
    %c0_i32 = arith.constant 0 : i32
    %c0_i32_0 = arith.constant 0 : i32
    %c0_i32_1 = arith.constant 0 : i32
    return %c0_i32, %c0_i32_0 : i32, i32
  }
  func.func @transform_2(%arg0: i32) -> (i32, i32) {
    %c0_i32 = arith.constant 0 : i32
    %c0_i32_0 = arith.constant 0 : i32
    %c0_i32_1 = arith.constant 0 : i32
    return %c0_i32, %c0_i32_0 : i32, i32
  }
  func.func @transform_3(%arg0: i32) -> (i32, i32) {
    %c0_i32 = arith.constant 0 : i32
    %c0_i32_0 = arith.constant 0 : i32
    %c0_i32_1 = arith.constant 0 : i32
    return %c0_i32, %c0_i32_0 : i32, i32
  }
  func.func @transform_4(%arg0: i32) -> (i32, i32) {
    %c0_i32 = arith.constant 0 : i32
    %c0_i32_0 = arith.constant 0 : i32
    return %arg0, %c0_i32 : i32, i32
  }
}

</mosaic_0001>

<llo_original>
// kernel: _lambda_.2
$region0: #{_lambda_.2}
  #allocation0 [shape = 'u32[]', space=smem, size = 0x4, offset = 0x4, fixed_abs, tag = 'smem constant byte address 0x4 - core index']
  #allocation1 [shape = 'u32[144,128]{1,0:T(1,128)}', space=vmem, size = 0x12000, scoped, tag = 'internal scratch']
  %s0 = inlined_call_operand.vmem [shape: bf16[128,180], index: 0, kind: input, shape index: {}]
  %s1 = inlined_call_operand.vmem [shape: bf16[180,256], index: 1, kind: input, shape index: {}]
  %s2 = inlined_call_operand.vmem [shape: f32[16,512], index: 2, kind: output, shape index: {}]
  %s3 = sld [smem:[#allocation0]]
  $region41: #{_lambda_.2} parent=0
    _
  %s5 = ssub.s32 1, %s3
  %s6 = scalar_select 0, %s5, %s3
  loop: start=0, step=1, limit=4
  $region2: #{_lambda_.2} parent=0 // loop_pre_header
    _
  $region3: #{_lambda_.2} parent=0 // loop_header
    %s8 = sphi 0, %s12
    %p9 = scmp.ge.s32.totalorder %s8, 4
    %s18 = sphi 0, %s20
    %s21 = sphi 0, %s18
    %s22 = sphi 0, %s21
    %s38 = sphi 0, %s22
    %s42 = sphi 0, %s42
    %s44 = sphi 0, %s42
    %s45 = sphi 0, %s44
    %s59 = sphi 0, %s45
    %s65 = sphi 0, %s67
    %s68 = sphi 0, %s65
    %s69 = sphi 0, %s68
    %s85 = sphi 0, %s69
  $region4: #{_lambda_.2} parent=0 // loop_header_branch
    %11 = sbr.rel (%p9) target = $region8
  $region5: #{_lambda_.2} parent=0 // loop_body
    %s13 = ssub.s32 %s8, 1
    %s14 = ssub.s32 %s8, 2
    %s15 = sadd.s32 %s8, 1
    %s16 = ssub.s32 %s8, %s15
    %p17 = scmp.eq.s32.totalorder %s16, 0
    %s19 = sadd.s32 %s18, 1
    %s20 = scalar_select %p17, %s18, %s19
    %p23 = pneg %p17
    %p24 = scmp.eq.s32.totalorder %s8, 1
    %p25 = por %p23, %p24
    %p26 = scmp.ne.s32.totalorder %s18, %s21
    %p27 = scmp.eq.s32.totalorder %s8, 0
    %p28 = por %p26, %p27
    %p29 = scmp.ne.s32.totalorder %s18, %s21
    %p30 = scmp.eq.s32.totalorder %s13, 1
    %p31 = por %p29, %p30
    %p32 = scmp.ne.s32.totalorder %s21, %s22
    %p33 = scmp.eq.s32.totalorder %s13, 0
    %p34 = por %p32, %p33
    %p35 = scmp.ne.s32.totalorder %s21, %s22
    %p36 = scmp.eq.s32.totalorder %s14, 1
    %p37 = por %p35, %p36
    %p39 = scmp.ne.s32.totalorder %s22, %s38
    %p40 = scmp.eq.s32.totalorder %s14, 0
    %p41 = por %p39, %p40
    %s43 = sadd.s32 %s42, 1
    %p46 = scmp.eq.s32.totalorder %s8, 1
    %p47 = scmp.ne.s32.totalorder %s42, %s44
    %p48 = scmp.eq.s32.totalorder %s8, 0
    %p49 = por %p47, %p48
    %p50 = scmp.ne.s32.totalorder %s42, %s44
    %p51 = scmp.eq.s32.totalorder %s13, 1
    %p52 = por %p50, %p51
    %p53 = scmp.ne.s32.totalorder %s44, %s45
    %p54 = scmp.eq.s32.totalorder %s13, 0
    %p55 = por %p53, %p54
    %p56 = scmp.ne.s32.totalorder %s44, %s45
    %p57 = scmp.eq.s32.totalorder %s14, 1
    %p58 = por %p56, %p57
    %p60 = scmp.ne.s32.totalorder %s45, %s59
    %p61 = scmp.eq.s32.totalorder %s14, 0
    %p62 = por %p60, %p61
    %s63 = ssub.s32 %s8, %s15
    %p64 = scmp.eq.s32.totalorder %s63, 0
    %s66 = sadd.s32 %s65, 1
    %s67 = scalar_select %p64, %s65, %s66
    %p70 = pneg %p64
    %p71 = scmp.eq.s32.totalorder %s8, 1
    %p72 = por %p70, %p71
    %p73 = scmp.ne.s32.totalorder %s65, %s68
    %p74 = scmp.eq.s32.totalorder %s8, 0
    %p75 = por %p73, %p74
    %p76 = scmp.ne.s32.totalorder %s65, %s68
    %p77 = scmp.eq.s32.totalorder %s13, 1
    %p78 = por %p76, %p77
    %p79 = scmp.ne.s32.totalorder %s68, %s69
    %p80 = scmp.eq.s32.totalorder %s13, 0
    %p81 = por %p79, %p80
    %p82 = scmp.ne.s32.totalorder %s68, %s69
    %p83 = scmp.eq.s32.totalorder %s14, 1
    %p84 = por %p82, %p83
    %p86 = scmp.ne.s32.totalorder %s69, %s85
    %p87 = scmp.eq.s32.totalorder %s14, 0
    %p88 = por %p86, %p87
    %p89 = scmp.le.s32.totalorder 1, %s8
    %p90 = scmp.lt.s32.totalorder %s8, 3
    %p91 = pnand %p89, %p90
    %p92 = pneg %p91
    // Predicated region
    $region9: #{_lambda_.2} parent=5 // pred_check
      _
    $region10: #{_lambda_.2} parent=5 // pred_check_branch
      %94 = sbr.rel (%p91) target = $region12
    $region11: #{_lambda_.2} parent=5 // pred_region
      %s95 = ssub.s32 %s8, 1
      // Predicated region
      $region13: #{_lambda_.2} parent=11 // pred_check
        %p96 = pneg %p55
      $region14: #{_lambda_.2} parent=11 // pred_check_branch
        %98 = sbr.rel (%p96) target = $region16
      $region15: #{_lambda_.2} parent=11 // pred_region
        _
      $region16: #{_lambda_.2} parent=11 // pred_fallthru
        _
    $region12: #{_lambda_.2} parent=5 // pred_fallthru
      _
    %p99 = scmp.lt.s32.totalorder %s8, 2
    // Predicated region
    $region17: #{_lambda_.2} parent=5 // pred_check
      %p100 = pneg %p99
    $region18: #{_lambda_.2} parent=5 // pred_check_branch
      %102 = sbr.rel (%p100) target = $region20
    $region19: #{_lambda_.2} parent=5 // pred_region
      // Predicated region
      $region21: #{_lambda_.2} parent=19 // pred_check
        %p103 = pneg %p28
      $region22: #{_lambda_.2} parent=19 // pred_check_branch
        %105 = sbr.rel (%p103) target = $region24
      $region23: #{_lambda_.2} parent=19 // pred_region
        %s106 = smul.u32 8, %s8
        %p107 = scmp.lt.s32.totalorder %s106, 15
        %s108 = scalar_select %p107, %s106, 15
        %s109 = smul.addr %s108, 2
        %s110 = smul.addr %s109, 4
        %s111 = scalar_lea.vmem %s0, %s110
        %s112 = smul.u32 8, %s8
      $region24: #{_lambda_.2} parent=19 // pred_fallthru
        _
    $region20: #{_lambda_.2} parent=5 // pred_fallthru
      _
    %p113 = scmp.le.s32.totalorder 1, %s8
    %p114 = scmp.lt.s32.totalorder %s8, 3
    %p115 = pnand %p113, %p114
    %p116 = pneg %p115
    // Predicated region
    $region25: #{_lambda_.2} parent=5 // pred_check
      _
    $region26: #{_lambda_.2} parent=5 // pred_check_branch
      %118 = sbr.rel (%p115) target = $region28
    $region27: #{_lambda_.2} parent=5 // pred_region
      %s119 = ssub.s32 %s8, 1
      %s120 = smul.u32 8, %s13
      %p121 = scmp.lt.s32.totalorder %s120, 15
      %s122 = scalar_select %p121, %s120, 15
      %s123 = smul.addr %s122, 2
      %s124 = smul.addr %s123, 4
      %s125 = scalar_lea.vmem %s0, %s124
      %p126 = pneg %p34
      %p127 = pneg %p31
      %p128 = pneg %p55
      %p129 = pneg %p52
      %p130 = pneg %p81
      %p131 = pneg %p78
      %p132 = scmp.lt.s32.totalorder %s13, 1
      %s133 = scalar_select %p132, %s13, 1
      %s134 = smul.addr %s133, 4
      %s135 = smul.addr %s134, 8
      %s136 = scalar_lea.vmem %s2, %s135
      %s137 = smul.u32 8, %s13
      %p138 = scmp.lt.s32.totalorder %s137, 15
      %s139 = scalar_select %p138, %s137, 15
      %s140 = smul.addr %s139, 2
      %s141 = smul.addr %s140, 4
      %s142 = scalar_lea.vmem %s0, %s141
      %s143 = smul.u32 8, %s13
      %p144 = scmp.lt.s32.totalorder %s13, 1
      %s145 = scalar_select %p144, %s13, 1
      %s146 = smul.addr %s145, 4
      %s147 = smul.addr %s146, 8
      %s148 = scalar_lea.vmem %s2, %s147
      %v150 = vld [vmem:[%s142] sm:$0xff]
      %v151 = vld [vmem:[%s142 + $0x8] sm:$0xff]
      %v152 = vld [vmem:[%s142 + $0x10] sm:$0xff]
      %v153 = vld [vmem:[%s142 + $0x18] sm:$0xff]
      %v154 = vld [vmem:[%s142 + $0x20] sm:$0xff]
      %v155 = vld [vmem:[%s142 + $0x28] sm:$0xff]
      %v156 = vld [vmem:[%s142 + $0x30] sm:$0xff]
      %v157 = vld [vmem:[%s142 + $0x38] sm:$0xff]
      %v158 = vld [vmem:[%s1] sm:$0xff]
      %v159 = vld [vmem:[%s1 + $0x8] sm:$0xff]
      %v160 = vld [vmem:[%s1 + $0x10] sm:$0xff]
      %v161 = vld [vmem:[%s1 + $0x18] sm:$0xff]
      %v162 = vld [vmem:[%s1 + $0x20] sm:$0xff]
      %v163 = vld [vmem:[%s1 + $0x28] sm:$0xff]
      %v164 = vld [vmem:[%s1 + $0x30] sm:$0xff]
      %v165 = vld [vmem:[%s1 + $0x38] sm:$0xff]
      %v166 = vld [vmem:[%s1 + $0x40] sm:$0xff]
      %v167 = vld [vmem:[%s1 + $0x48] sm:$0xff]
      %v168 = vld [vmem:[%s1 + $0x50] sm:$0xff]
      %v169 = vld [vmem:[%s1 + $0x58] sm:$0xff]
      %v170 = vld [vmem:[%s1 + $0x60] sm:$0xff]
      %v171 = vld [vmem:[%s1 + $0x68] sm:$0xff]
      %v172 = vld [vmem:[%s1 + $0x70] sm:$0xff]
      %v173 = vld [vmem:[%s1 + $0x78] sm:$0xff]
      %v174 = vld [vmem:[%s1 + $0x80] sm:$0xff]
      %v175 = vld [vmem:[%s1 + $0x88] sm:$0xff]
      %v176 = vld [vmem:[%s1 + $0x90] sm:$0xff]
      %v177 = vld [vmem:[%s1 + $0x98] sm:$0xff]
      %v178 = vld [vmem:[%s1 + $0xa0] sm:$0xff]
      %v179 = vld [vmem:[%s1 + $0xa8] sm:$0xff]
      %v180 = vld [vmem:[%s1 + $0xb0] sm:$0x33]
      %v189 = vunpack.c.l.b16 %v150
      %v190 = vunpack.c.h.b16 %v150
      %v191 = vunpack.c.l.b16 %v151
      %v192 = vunpack.c.h.b16 %v151
      %v193 = vunpack.c.l.b16 %v152
      %v194 = vunpack.c.h.b16 %v152
      %v195 = vunpack.c.l.b16 %v153
      %v196 = vunpack.c.h.b16 %v153
      %v197 = vunpack.c.l.b16 %v154
      %v198 = vunpack.c.h.b16 %v154
      %v199 = vunpack.c.l.b16 %v155
      %v200 = vunpack.c.h.b16 %v155
      %v201 = vunpack.c.l.b16 %v156
      %v202 = vunpack.c.h.b16 %v156
      %v203 = vunpack.c.l.b16 %v157
      %v204 = vunpack.c.h.b16 %v157
      %v205 = vpack.c.b16 %v191, %v189
      %v206 = vpack.c.b16 %v192, %v190
      %v207 = vpack.c.b16 %v195, %v193
      %v208 = vpack.c.b16 %v196, %v194
      %v209 = vpack.c.b16 %v199, %v197
      %v210 = vpack.c.b16 %v200, %v198
      %v211 = vpack.c.b16 %v203, %v201
      %v212 = vpack.c.b16 %v204, %v202
      %v240 = vunpack.c.l.b16 %v158
      %v241 = vunpack.c.h.b16 %v158
      %v242 = vunpack.c.l.b16 %v159
      %v243 = vunpack.c.h.b16 %v159
      %v244 = vunpack.c.l.b16 %v160
      %v245 = vunpack.c.h.b16 %v160
      %v246 = vunpack.c.l.b16 %v161
      %v247 = vunpack.c.h.b16 %v161
      %v248 = vunpack.c.l.b16 %v162
      %v249 = vunpack.c.h.b16 %v162
      %v250 = vunpack.c.l.b16 %v163
      %v251 = vunpack.c.h.b16 %v163
      %v252 = vunpack.c.l.b16 %v164
      %v253 = vunpack.c.h.b16 %v164
      %v254 = vunpack.c.l.b16 %v165
      %v255 = vunpack.c.h.b16 %v165
      %v256 = vunpack.c.l.b16 %v166
      %v257 = vunpack.c.h.b16 %v166
      %v258 = vunpack.c.l.b16 %v167
      %v259 = vunpack.c.h.b16 %v167
      %v260 = vunpack.c.l.b16 %v168
      %v261 = vunpack.c.h.b16 %v168
      %v262 = vunpack.c.l.b16 %v169
      %v263 = vunpack.c.h.b16 %v169
      %v264 = vunpack.c.l.b16 %v170
      %v265 = vunpack.c.h.b16 %v170
      %v266 = vunpack.c.l.b16 %v171
      %v267 = vunpack.c.h.b16 %v171
      %v268 = vunpack.c.l.b16 %v172
      %v269 = vunpack.c.h.b16 %v172
      %v270 = vunpack.c.l.b16 %v173
      %v271 = vunpack.c.h.b16 %v173
      %v272 = vunpack.c.l.b16 %v174
      %v273 = vunpack.c.h.b16 %v174
      %v274 = vunpack.c.l.b16 %v175
      %v275 = vunpack.c.h.b16 %v175
      %v276 = vunpack.c.l.b16 %v176
      %v277 = vunpack.c.h.b16 %v176
      %v278 = vunpack.c.l.b16 %v177
      %v279 = vunpack.c.h.b16 %v177
      %v280 = vunpack.c.l.b16 %v178
      %v281 = vunpack.c.h.b16 %v178
      %v282 = vunpack.c.l.b16 %v179
      %v283 = vunpack.c.h.b16 %v179
      %v284 = vunpack.c.l.b16 %v180
      %v285 = vunpack.c.h.b16 %v180
      %v286 = vpack.c.b16 %v242, %v240
      %v287 = vpack.c.b16 %v243, %v241
      %v288 = vpack.c.b16 %v246, %v244
      %v289 = vpack.c.b16 %v247, %v245
      %v290 = vpack.c.b16 %v250, %v248
      %v291 = vpack.c.b16 %v251, %v249
      %v292 = vpack.c.b16 %v254, %v252
      %v293 = vpack.c.b16 %v255, %v253
      %v294 = vpack.c.b16 %v258, %v256
      %v295 = vpack.c.b16 %v259, %v257
      %v296 = vpack.c.b16 %v262, %v260
      %v297 = vpack.c.b16 %v263, %v261
      %v298 = vpack.c.b16 %v266, %v264
      %v299 = vpack.c.b16 %v267, %v265
      %v300 = vpack.c.b16 %v270, %v268
      %v301 = vpack.c.b16 %v271, %v269
      %v302 = vpack.c.b16 %v274, %v272
      %v303 = vpack.c.b16 %v275, %v273
      %v304 = vpack.c.b16 %v278, %v276
      %v305 = vpack.c.b16 %v279, %v277
      %v306 = vpack.c.b16 %v282, %v280
      %v307 = vpack.c.b16 %v283, %v281
      %v308 = vpack.c.b16 %v284, %v284
      %v309 = vpack.c.b16 %v285, %v285
      %vm332 = vcmask 424960
      %v334 = vsel %vm332, %v206, 0
      %v337 = vsel %vm332, %v208, 0
      %v340 = vsel %vm332, %v210, 0
      %v343 = vsel %vm332, %v212, 0
      %vm345 = vcmask 1041408
      %v347 = vsel %vm345, %v308, 0
      %v350 = vsel %vm345, %v309, 0
      %352 = vmatprep.subr.bf16.mxu0 %v287
      %353 = vmatpush1.bf16.msra.mxu0 %v286
      %354 = vmatprep.subr.bf16.mxu0 %v289
      %355 = vmatpush1.bf16.msra.mxu0 %v288
      %356 = vmatprep.subr.bf16.mxu0 %v291
      %357 = vmatpush1.bf16.msra.mxu0 %v290
      %358 = vmatprep.subr.bf16.mxu0 %v293
      %359 = vmatpush1.bf16.msra.mxu0 %v292
      %360 = vmatprep.subr.bf16.mxu0 %v295
      %361 = vmatpush1.bf16.msra.mxu0 %v294
      %362 = vmatprep.subr.bf16.mxu0 %v297
      %363 = vmatpush1.bf16.msra.mxu0 %v296
      %364 = vmatprep.subr.bf16.mxu0 %v299
      %365 = vmatpush1.bf16.msra.mxu0 %v298
      %366 = vmatprep.subr.bf16.mxu0 %v301
      %367 = vmatpush1.bf16.msra.mxu0 %v300
      %368 = vmatprep.subr.bf16.mxu0 %v303
      %369 = vmatpush1.bf16.msra.mxu0 %v302
      %370 = vmatprep.subr.bf16.mxu0 %v305
      %371 = vmatpush1.bf16.msra.mxu0 %v304
      %372 = vmatprep.subr.bf16.mxu0 %v307
      %373 = vmatpush1.bf16.msra.mxu0 %v306
      %374 = vmatprep.subr.bf16.mxu0 %v350
      %375 = vmatpush1.bf16.msra.mxu0 %v347
      %376 = vmatprep.subr.bf16.mxu0 0
      %377 = vmatpush1.bf16.msra.mxu0 0
      %378 = vmatprep.subr.bf16.mxu0 0
      %379 = vmatpush1.bf16.msra.mxu0 0
      %380 = vmatprep.subr.bf16.mxu0 0
      %381 = vmatpush1.bf16.msra.mxu0 0
      %382 = vmatprep.subr.bf16.mxu0 0
      %383 = vmatpush1.bf16.msra.mxu0 0
      %384 = vmatprep.mubr.bf16.mxu0 %v334
      %385 = vmatmul.mubr.bf16.gmra.mrb[0].mxu0 %v205
      %v386 = vpop.f32.mrb[0].mxu0
      %v387 = vadd.f32 0.0, %v386
      %v388 = vpop.f32.mrb[0].mxu0
      %v389 = vadd.f32 0.0, %v388
      %v390 = vpop.f32.mrb[0].mxu0
      %v391 = vadd.f32 0.0, %v390
      %v392 = vpop.f32.mrb[0].mxu0
      %v393 = vadd.f32 0.0, %v392
      %394 = vmatprep.mubr.bf16.mxu0 %v337
      %395 = vmatmul.mubr.bf16.gmra.mrb[0].mxu0 %v207
      %v396 = vpop.f32.mrb[0].mxu0
      %v397 = vadd.f32 0.0, %v396
      %v398 = vpop.f32.mrb[0].mxu0
      %v399 = vadd.f32 0.0, %v398
      %v400 = vpop.f32.mrb[0].mxu0
      %v401 = vadd.f32 0.0, %v400
      %v402 = vpop.f32.mrb[0].mxu0
      %v403 = vadd.f32 0.0, %v402
      %404 = vmatprep.mubr.bf16.mxu0 %v340
      %405 = vmatmul.mubr.bf16.gmra.mrb[0].mxu0 %v209
      %v406 = vpop.f32.mrb[0].mxu0
      %v407 = vadd.f32 0.0, %v406
      %v408 = vpop.f32.mrb[0].mxu0
      %v409 = vadd.f32 0.0, %v408
      %v410 = vpop.f32.mrb[0].mxu0
      %v411 = vadd.f32 0.0, %v410
      %v412 = vpop.f32.mrb[0].mxu0
      %v413 = vadd.f32 0.0, %v412
      %414 = vmatprep.mubr.bf16.mxu0 %v343
      %415 = vmatmul.mubr.bf16.gmra.mrb[0].mxu0 %v211
      %v416 = vpop.f32.mrb[0].mxu0
      %v417 = vadd.f32 0.0, %v416
      %v418 = vpop.f32.mrb[0].mxu0
      %v419 = vadd.f32 0.0, %v418
      %v420 = vpop.f32.mrb[0].mxu0
      %v421 = vadd.f32 0.0, %v420
      %v422 = vpop.f32.mrb[0].mxu0
      %v423 = vadd.f32 0.0, %v422
      %424 = vdwg.mxu0
      %v425 = vadd.f32 %v387, %v391
      %v426 = vadd.f32 %v425, %v397
      %v427 = vadd.f32 %v426, %v401
      %v428 = vadd.f32 %v427, %v407
      %v429 = vadd.f32 %v428, %v411
      %v430 = vadd.f32 %v429, %v417
      %v431 = vadd.f32 %v430, %v421
      %v432 = vrot.slane %v431, 4
      %v433 = vadd.f32 %v431, %v432
      %v434 = vrot.slane %v433, 2
      %v435 = vadd.f32 %v433, %v434
      %v436 = vrot.slane %v435, 1
      %v437 = vadd.f32 %v435, %v436
      %v438 = vadd.f32 %v389, %v393
      %v439 = vadd.f32 %v438, %v399
      %v440 = vadd.f32 %v439, %v403
      %v441 = vadd.f32 %v440, %v409
      %v442 = vadd.f32 %v441, %v413
      %v443 = vadd.f32 %v442, %v419
      %v444 = vadd.f32 %v443, %v423
      %v445 = vrot.slane %v444, 4
      %v446 = vadd.f32 %v444, %v445
      %v447 = vrot.slane %v446, 2
      %v448 = vadd.f32 %v446, %v447
      %v449 = vrot.slane %v448, 1
      %v450 = vadd.f32 %v448, %v449
      %v451 = vmul.f32 %v387, %v387
      %v452 = vmul.f32 %v389, %v389
      %v453 = vmul.f32 %v391, %v391
      %v454 = vmul.f32 %v393, %v393
      %v455 = vmul.f32 %v397, %v397
      %v456 = vmul.f32 %v399, %v399
      %v457 = vmul.f32 %v401, %v401
      %v458 = vmul.f32 %v403, %v403
      %v459 = vmul.f32 %v407, %v407
      %v460 = vmul.f32 %v409, %v409
      %v461 = vmul.f32 %v411, %v411
      %v462 = vmul.f32 %v413, %v413
      %v463 = vmul.f32 %v417, %v417
      %v464 = vmul.f32 %v419, %v419
      %v465 = vmul.f32 %v421, %v421
      %v466 = vmul.f32 %v423, %v423
      %v467 = vadd.f32 %v451, %v453
      %v468 = vadd.f32 %v467, %v455
      %v469 = vadd.f32 %v468, %v457
      %v470 = vadd.f32 %v469, %v459
      %v471 = vadd.f32 %v470, %v461
      %v472 = vadd.f32 %v471, %v463
      %v473 = vadd.f32 %v472, %v465
      %v474 = vrot.slane %v473, 4
      %v475 = vadd.f32 %v473, %v474
      %v476 = vrot.slane %v475, 2
      %v477 = vadd.f32 %v475, %v476
      %v478 = vrot.slane %v477, 1
      %v479 = vadd.f32 %v477, %v478
      %v480 = vadd.f32 %v452, %v454
      %v481 = vadd.f32 %v480, %v456
      %v482 = vadd.f32 %v481, %v458
      %v483 = vadd.f32 %v482, %v460
      %v484 = vadd.f32 %v483, %v462
      %v485 = vadd.f32 %v484, %v464
      %v486 = vadd.f32 %v485, %v466
      %v487 = vrot.slane %v486, 4
      %v488 = vadd.f32 %v486, %v487
      %v489 = vrot.slane %v488, 2
      %v490 = vadd.f32 %v488, %v489
      %v491 = vrot.slane %v490, 1
      %v492 = vadd.f32 %v490, %v491
      %v493 = vlaneseq
      %v494 = vshrl.u32 %v493, 7
      %v495 = vsub.s32 0, %v494
      %v496 = vrot.slane %v437, %v495
      %v497 = vlaneseq
      %v498 = vshrl.u32 %v497, 7
      %v499 = vsub.s32 0, %v498
      %v500 = vrot.slane %v450, %v499
      %v501 = vlaneseq
      %v502 = vshrl.u32 %v501, 7
      %v503 = vsub.s32 0, %v502
      %v504 = vrot.slane %v479, %v503
      %v505 = vlaneseq
      %v506 = vshrl.u32 %v505, 7
      %v507 = vsub.s32 0, %v506
      %v508 = vrot.slane %v492, %v507
      %509 = vst [vmem:[%s148] sm:$0xff] %v496
      %510 = vst [vmem:[%s148 + $0x8] sm:$0xff] %v500
      %511 = vst [vmem:[%s148 + $0x10] sm:$0xff] %v504
      %512 = vst [vmem:[%s148 + $0x18] sm:$0xff] %v508
      %p513 = scmp.lt.s32.totalorder %s13, 1
      %s514 = scalar_select %p513, %s13, 1
      %s515 = smul.addr %s514, 4
      %s516 = smul.addr %s515, 8
      %s517 = scalar_lea.vmem %s2, %s516
      // Predicated region
      $region29: #{_lambda_.2} parent=27 // pred_check
        %p518 = pneg %p78
      $region30: #{_lambda_.2} parent=27 // pred_check_branch
        %520 = sbr.rel (%p518) target = $region32
      $region31: #{_lambda_.2} parent=27 // pred_region
        _
      $region32: #{_lambda_.2} parent=27 // pred_fallthru
        _
    $region28: #{_lambda_.2} parent=5 // pred_fallthru
      _
    %p521 = scmp.le.s32.totalorder 2, %s8
    // Predicated region
    $region33: #{_lambda_.2} parent=5 // pred_check
      %p522 = pneg %p521
    $region34: #{_lambda_.2} parent=5 // pred_check_branch
      %524 = sbr.rel (%p522) target = $region36
    $region35: #{_lambda_.2} parent=5 // pred_region
      %s525 = ssub.s32 %s8, 2
      // Predicated region
      $region37: #{_lambda_.2} parent=35 // pred_check
        %p526 = pneg %p84
      $region38: #{_lambda_.2} parent=35 // pred_check_branch
        %528 = sbr.rel (%p526) target = $region40
      $region39: #{_lambda_.2} parent=35 // pred_region
        %p529 = scmp.lt.s32.totalorder %s14, 1
        %s530 = scalar_select %p529, %s14, 1
        %s531 = smul.addr %s530, 4
        %s532 = smul.addr %s531, 8
        %s533 = scalar_lea.vmem %s2, %s532
      $region40: #{_lambda_.2} parent=35 // pred_fallthru
        _
    $region36: #{_lambda_.2} parent=5 // pred_fallthru
      _
  $region6: #{_lambda_.2} parent=0 // loop_footer
    %s12 = sadd.s32 1, %s8
  $region7: #{_lambda_.2} parent=0 // loop_footer_branch
    %7 = sbr.rel target = $region3
  $region8: #{_lambda_.2} parent=0 // loop_exit
    _

// kernel: _lambda_.3
$region0: #{_lambda_.3}
  #allocation0 [shape = 'u32[]', space=smem, size = 0x4, offset = 0x4, fixed_abs, tag = 'smem constant byte address 0x4 - core index']
  #allocation1 [shape = 'u32[144,128]{1,0:T(1,128)}', space=vmem, size = 0x12000, scoped, tag = 'internal scratch']
  %s0 = inlined_call_operand.vmem [shape: bf16[128,180], index: 0, kind: input, shape index: {}]
  %s1 = inlined_call_operand.vmem [shape: bf16[180,256], index: 1, kind: input, shape index: {}]
  %s2 = inlined_call_operand.vmem [shape: f32[1,256], index: 2, kind: input, shape index: {}]
  %s3 = inlined_call_operand.vmem [shape: f32[1,256], index: 3, kind: input, shape index: {}]
  %s4 = inlined_call_operand.hbm [shape: bf16[128,256], index: 4, kind: output, shape index: {}]
  %s5 = sld [smem:[#allocation0]]
  $region49: #{_lambda_.3} parent=0
    _
  %s7 = ssub.s32 1, %s5
  %s8 = scalar_select 0, %s7, %s5
  $region1: #{_lambda_.3} parent=0
    #allocation2 [shape = 'u8[65536]{0}', space=vmem, size = 0x10000, scoped, tag = 'output window, operand 0']
    #allocation3 [shape = 's32[2]{0}', space=sflag, size = 0x8, scoped, tag = 'scoped memory for _lambda_.3']
    %9 = vsyncpa [#allocation3], 0
    %s10 = scalar_lea.sflag [#allocation3], 1
    %11 = vsyncpa %s10, 0
    loop: start=0, step=1, limit=4
    $region2: #{_lambda_.3} parent=1 // loop_pre_header
      _
    $region3: #{_lambda_.3} parent=1 // loop_header
      %s13 = sphi 0, %s17
      %p14 = scmp.ge.s32.totalorder %s13, 4
      %s23 = sphi 0, %s25
      %s26 = sphi 0, %s23
      %s27 = sphi 0, %s26
      %s43 = sphi 0, %s27
      %s47 = sphi 0, %s47
      %s49 = sphi 0, %s47
      %s50 = sphi 0, %s49
      %s64 = sphi 0, %s50
      %s68 = sphi 0, %s68
      %s70 = sphi 0, %s68
      %s71 = sphi 0, %s70
      %s85 = sphi 0, %s71
      %s89 = sphi 0, %s89
      %s91 = sphi 0, %s89
      %s92 = sphi 0, %s91
      %s106 = sphi 0, %s92
      %s112 = sphi 0, %s114
      %s115 = sphi 0, %s112
      %s116 = sphi 0, %s115
      %s132 = sphi 0, %s116
    $region4: #{_lambda_.3} parent=1 // loop_header_branch
      %16 = sbr.rel (%p14) target = $region8
    $region5: #{_lambda_.3} parent=1 // loop_body
      %s18 = ssub.s32 %s13, 1
      %s19 = ssub.s32 %s13, 2
      %s20 = sadd.s32 %s13, 1
      %s21 = ssub.s32 %s13, %s20
      %p22 = scmp.eq.s32.totalorder %s21, 0
      %s24 = sadd.s32 %s23, 1
      %s25 = scalar_select %p22, %s23, %s24
      %p28 = pneg %p22
      %p29 = scmp.eq.s32.totalorder %s13, 1
      %p30 = por %p28, %p29
      %p31 = scmp.ne.s32.totalorder %s23, %s26
      %p32 = scmp.eq.s32.totalorder %s13, 0
      %p33 = por %p31, %p32
      %p34 = scmp.ne.s32.totalorder %s23, %s26
      %p35 = scmp.eq.s32.totalorder %s18, 1
      %p36 = por %p34, %p35
      %p37 = scmp.ne.s32.totalorder %s26, %s27
      %p38 = scmp.eq.s32.totalorder %s18, 0
      %p39 = por %p37, %p38
      %p40 = scmp.ne.s32.totalorder %s26, %s27
      %p41 = scmp.eq.s32.totalorder %s19, 1
      %p42 = por %p40, %p41
      %p44 = scmp.ne.s32.totalorder %s27, %s43
      %p45 = scmp.eq.s32.totalorder %s19, 0
      %p46 = por %p44, %p45
      %s48 = sadd.s32 %s47, 1
      %p51 = scmp.eq.s32.totalorder %s13, 1
      %p52 = scmp.ne.s32.totalorder %s47, %s49
      %p53 = scmp.eq.s32.totalorder %s13, 0
      %p54 = por %p52, %p53
      %p55 = scmp.ne.s32.totalorder %s47, %s49
      %p56 = scmp.eq.s32.totalorder %s18, 1
      %p57 = por %p55, %p56
      %p58 = scmp.ne.s32.totalorder %s49, %s50
      %p59 = scmp.eq.s32.totalorder %s18, 0
      %p60 = por %p58, %p59
      %p61 = scmp.ne.s32.totalorder %s49, %s50
      %p62 = scmp.eq.s32.totalorder %s19, 1
      %p63 = por %p61, %p62
      %p65 = scmp.ne.s32.totalorder %s50, %s64
      %p66 = scmp.eq.s32.totalorder %s19, 0
      %p67 = por %p65, %p66
      %s69 = sadd.s32 %s68, 1
      %p72 = scmp.eq.s32.totalorder %s13, 1
      %p73 = scmp.ne.s32.totalorder %s68, %s70
      %p74 = scmp.eq.s32.totalorder %s13, 0
      %p75 = por %p73, %p74
      %p76 = scmp.ne.s32.totalorder %s68, %s70
      %p77 = scmp.eq.s32.totalorder %s18, 1
      %p78 = por %p76, %p77
      %p79 = scmp.ne.s32.totalorder %s70, %s71
      %p80 = scmp.eq.s32.totalorder %s18, 0
      %p81 = por %p79, %p80
      %p82 = scmp.ne.s32.totalorder %s70, %s71
      %p83 = scmp.eq.s32.totalorder %s19, 1
      %p84 = por %p82, %p83
      %p86 = scmp.ne.s32.totalorder %s71, %s85
      %p87 = scmp.eq.s32.totalorder %s19, 0
      %p88 = por %p86, %p87
      %s90 = sadd.s32 %s89, 1
      %p93 = scmp.eq.s32.totalorder %s13, 1
      %p94 = scmp.ne.s32.totalorder %s89, %s91
      %p95 = scmp.eq.s32.totalorder %s13, 0
      %p96 = por %p94, %p95
      %p97 = scmp.ne.s32.totalorder %s89, %s91
      %p98 = scmp.eq.s32.totalorder %s18, 1
      %p99 = por %p97, %p98
      %p100 = scmp.ne.s32.totalorder %s91, %s92
      %p101 = scmp.eq.s32.totalorder %s18, 0
      %p102 = por %p100, %p101
      %p103 = scmp.ne.s32.totalorder %s91, %s92
      %p104 = scmp.eq.s32.totalorder %s19, 1
      %p105 = por %p103, %p104
      %p107 = scmp.ne.s32.totalorder %s92, %s106
      %p108 = scmp.eq.s32.totalorder %s19, 0
      %p109 = por %p107, %p108
      %s110 = ssub.s32 %s13, %s20
      %p111 = scmp.eq.s32.totalorder %s110, 0
      %s113 = sadd.s32 %s112, 1
      %s114 = scalar_select %p111, %s112, %s113
      %p117 = pneg %p111
      %p118 = scmp.eq.s32.totalorder %s13, 1
      %p119 = por %p117, %p118
      %p120 = scmp.ne.s32.totalorder %s112, %s115
      %p121 = scmp.eq.s32.totalorder %s13, 0
      %p122 = por %p120, %p121
      %p123 = scmp.ne.s32.totalorder %s112, %s115
      %p124 = scmp.eq.s32.totalorder %s18, 1
      %p125 = por %p123, %p124
      %p126 = scmp.ne.s32.totalorder %s115, %s116
      %p127 = scmp.eq.s32.totalorder %s18, 0
      %p128 = por %p126, %p127
      %p129 = scmp.ne.s32.totalorder %s115, %s116
      %p130 = scmp.eq.s32.totalorder %s19, 1
      %p131 = por %p129, %p130
      %p133 = scmp.ne.s32.totalorder %s116, %s132
      %p134 = scmp.eq.s32.totalorder %s19, 0
      %p135 = por %p133, %p134
      %p136 = scmp.le.s32.totalorder 1, %s13
      %p137 = scmp.lt.s32.totalorder %s13, 3
      %p138 = pnand %p136, %p137
      %p139 = pneg %p138
      // Predicated region
      $region9: #{_lambda_.3} parent=5 // pred_check
        _
      $region10: #{_lambda_.3} parent=5 // pred_check_branch
        %141 = sbr.rel (%p138) target = $region12
      $region11: #{_lambda_.3} parent=5 // pred_region
        %s142 = ssub.s32 %s13, 1
        // Predicated region
        $region13: #{_lambda_.3} parent=11 // pred_check
          %p143 = pneg %p60
        $region14: #{_lambda_.3} parent=11 // pred_check_branch
          %145 = sbr.rel (%p143) target = $region16
        $region15: #{_lambda_.3} parent=11 // pred_region
          _
        $region16: #{_lambda_.3} parent=11 // pred_fallthru
          _
        // Predicated region
        $region17: #{_lambda_.3} parent=11 // pred_check
          %p146 = pneg %p81
        $region18: #{_lambda_.3} parent=11 // pred_check_branch
          %148 = sbr.rel (%p146) target = $region20
        $region19: #{_lambda_.3} parent=11 // pred_region
          _
        $region20: #{_lambda_.3} parent=11 // pred_fallthru
          _
        // Predicated region
        $region21: #{_lambda_.3} parent=11 // pred_check
          %p149 = pneg %p102
        $region22: #{_lambda_.3} parent=11 // pred_check_branch
          %151 = sbr.rel (%p149) target = $region24
        $region23: #{_lambda_.3} parent=11 // pred_region
          _
        $region24: #{_lambda_.3} parent=11 // pred_fallthru
          _
      $region12: #{_lambda_.3} parent=5 // pred_fallthru
        _
      %p152 = scmp.lt.s32.totalorder %s13, 2
      // Predicated region
      $region25: #{_lambda_.3} parent=5 // pred_check
        %p153 = pneg %p152
      $region26: #{_lambda_.3} parent=5 // pred_check_branch
        %155 = sbr.rel (%p153) target = $region28
      $region27: #{_lambda_.3} parent=5 // pred_region
        // Predicated region
        $region29: #{_lambda_.3} parent=27 // pred_check
          %p156 = pneg %p33
        $region30: #{_lambda_.3} parent=27 // pred_check_branch
          %158 = sbr.rel (%p156) target = $region32
        $region31: #{_lambda_.3} parent=27 // pred_region
          %s159 = smul.u32 8, %s13
          %p160 = scmp.lt.s32.totalorder %s159, 15
          %s161 = scalar_select %p160, %s159, 15
          %s162 = smul.addr %s161, 2
          %s163 = smul.addr %s162, 4
          %s164 = scalar_lea.vmem %s0, %s163
          %s165 = smul.u32 8, %s13
        $region32: #{_lambda_.3} parent=27 // pred_fallthru
          _
      $region28: #{_lambda_.3} parent=5 // pred_fallthru
        _
      %p166 = scmp.le.s32.totalorder 1, %s13
      %p167 = scmp.lt.s32.totalorder %s13, 3
      %p168 = pnand %p166, %p167
      %p169 = pneg %p168
      // Predicated region
      $region33: #{_lambda_.3} parent=5 // pred_check
        _
      $region34: #{_lambda_.3} parent=5 // pred_check_branch
        %171 = sbr.rel (%p168) target = $region36
      $region35: #{_lambda_.3} parent=5 // pred_region
        %s172 = ssub.s32 %s13, 1
        %s173 = smul.u32 8, %s18
        %p174 = scmp.lt.s32.totalorder %s173, 15
        %s175 = scalar_select %p174, %s173, 15
        %s176 = smul.addr %s175, 2
        %s177 = smul.addr %s176, 4
        %s178 = scalar_lea.vmem %s0, %s177
        %p179 = pneg %p39
        %p180 = pneg %p36
        %p181 = pneg %p60
        %p182 = pneg %p57
        %p183 = pneg %p81
        %p184 = pneg %p78
        %p185 = pneg %p102
        %p186 = pneg %p99
        %p187 = pneg %p128
        %p188 = pneg %p125
        %s189 = sand.u32 %s115, 1
        %s190 = scalar_lea.sflag [#allocation3], %s189
        %s191 = sand.u32 %s115, 1
        %s192 = smul.addr %s191, 64
        %s193 = scalar_lea.vmem [#allocation2], %s192
        %s194 = smul.u32 8, %s18
        %p195 = scmp.lt.s32.totalorder %s194, 15
        %s196 = scalar_select %p195, %s194, 15
        %s197 = smul.addr %s196, 2
        %s198 = smul.addr %s197, 4
        %s199 = scalar_lea.vmem %s0, %s198
        %s200 = smul.u32 8, %s18
        %s201 = smul.u32 8, %s18
        %v203 = vld [vmem:[%s199] sm:$0xff]
        %v204 = vld [vmem:[%s199 + $0x8] sm:$0xff]
        %v205 = vld [vmem:[%s199 + $0x10] sm:$0xff]
        %v206 = vld [vmem:[%s199 + $0x18] sm:$0xff]
        %v207 = vld [vmem:[%s199 + $0x20] sm:$0xff]
        %v208 = vld [vmem:[%s199 + $0x28] sm:$0xff]
        %v209 = vld [vmem:[%s199 + $0x30] sm:$0xff]
        %v210 = vld [vmem:[%s199 + $0x38] sm:$0xff]
        %v211 = vld [vmem:[%s1] sm:$0xff]
        %v212 = vld [vmem:[%s1 + $0x8] sm:$0xff]
        %v213 = vld [vmem:[%s1 + $0x10] sm:$0xff]
        %v214 = vld [vmem:[%s1 + $0x18] sm:$0xff]
        %v215 = vld [vmem:[%s1 + $0x20] sm:$0xff]
        %v216 = vld [vmem:[%s1 + $0x28] sm:$0xff]
        %v217 = vld [vmem:[%s1 + $0x30] sm:$0xff]
        %v218 = vld [vmem:[%s1 + $0x38] sm:$0xff]
        %v219 = vld [vmem:[%s1 + $0x40] sm:$0xff]
        %v220 = vld [vmem:[%s1 + $0x48] sm:$0xff]
        %v221 = vld [vmem:[%s1 + $0x50] sm:$0xff]
        %v222 = vld [vmem:[%s1 + $0x58] sm:$0xff]
        %v223 = vld [vmem:[%s1 + $0x60] sm:$0xff]
        %v224 = vld [vmem:[%s1 + $0x68] sm:$0xff]
        %v225 = vld [vmem:[%s1 + $0x70] sm:$0xff]
        %v226 = vld [vmem:[%s1 + $0x78] sm:$0xff]
        %v227 = vld [vmem:[%s1 + $0x80] sm:$0xff]
        %v228 = vld [vmem:[%s1 + $0x88] sm:$0xff]
        %v229 = vld [vmem:[%s1 + $0x90] sm:$0xff]
        %v230 = vld [vmem:[%s1 + $0x98] sm:$0xff]
        %v231 = vld [vmem:[%s1 + $0xa0] sm:$0xff]
        %v232 = vld [vmem:[%s1 + $0xa8] sm:$0xff]
        %v233 = vld [vmem:[%s1 + $0xb0] sm:$0x33]
        %v242 = vunpack.c.l.b16 %v203
        %v243 = vunpack.c.h.b16 %v203
        %v244 = vunpack.c.l.b16 %v204
        %v245 = vunpack.c.h.b16 %v204
        %v246 = vunpack.c.l.b16 %v205
        %v247 = vunpack.c.h.b16 %v205
        %v248 = vunpack.c.l.b16 %v206
        %v249 = vunpack.c.h.b16 %v206
        %v250 = vunpack.c.l.b16 %v207
        %v251 = vunpack.c.h.b16 %v207
        %v252 = vunpack.c.l.b16 %v208
        %v253 = vunpack.c.h.b16 %v208
        %v254 = vunpack.c.l.b16 %v209
        %v255 = vunpack.c.h.b16 %v209
        %v256 = vunpack.c.l.b16 %v210
        %v257 = vunpack.c.h.b16 %v210
        %v258 = vpack.c.b16 %v244, %v242
        %v259 = vpack.c.b16 %v245, %v243
        %v260 = vpack.c.b16 %v248, %v246
        %v261 = vpack.c.b16 %v249, %v247
        %v262 = vpack.c.b16 %v252, %v250
        %v263 = vpack.c.b16 %v253, %v251
        %v264 = vpack.c.b16 %v256, %v254
        %v265 = vpack.c.b16 %v257, %v255
        %v293 = vunpack.c.l.b16 %v211
        %v294 = vunpack.c.h.b16 %v211
        %v295 = vunpack.c.l.b16 %v212
        %v296 = vunpack.c.h.b16 %v212
        %v297 = vunpack.c.l.b16 %v213
        %v298 = vunpack.c.h.b16 %v213
        %v299 = vunpack.c.l.b16 %v214
        %v300 = vunpack.c.h.b16 %v214
        %v301 = vunpack.c.l.b16 %v215
        %v302 = vunpack.c.h.b16 %v215
        %v303 = vunpack.c.l.b16 %v216
        %v304 = vunpack.c.h.b16 %v216
        %v305 = vunpack.c.l.b16 %v217
        %v306 = vunpack.c.h.b16 %v217
        %v307 = vunpack.c.l.b16 %v218
        %v308 = vunpack.c.h.b16 %v218
        %v309 = vunpack.c.l.b16 %v219
        %v310 = vunpack.c.h.b16 %v219
        %v311 = vunpack.c.l.b16 %v220
        %v312 = vunpack.c.h.b16 %v220
        %v313 = vunpack.c.l.b16 %v221
        %v314 = vunpack.c.h.b16 %v221
        %v315 = vunpack.c.l.b16 %v222
        %v316 = vunpack.c.h.b16 %v222
        %v317 = vunpack.c.l.b16 %v223
        %v318 = vunpack.c.h.b16 %v223
        %v319 = vunpack.c.l.b16 %v224
        %v320 = vunpack.c.h.b16 %v224
        %v321 = vunpack.c.l.b16 %v225
        %v322 = vunpack.c.h.b16 %v225
        %v323 = vunpack.c.l.b16 %v226
        %v324 = vunpack.c.h.b16 %v226
        %v325 = vunpack.c.l.b16 %v227
        %v326 = vunpack.c.h.b16 %v227
        %v327 = vunpack.c.l.b16 %v228
        %v328 = vunpack.c.h.b16 %v228
        %v329 = vunpack.c.l.b16 %v229
        %v330 = vunpack.c.h.b16 %v229
        %v331 = vunpack.c.l.b16 %v230
        %v332 = vunpack.c.h.b16 %v230
        %v333 = vunpack.c.l.b16 %v231
        %v334 = vunpack.c.h.b16 %v231
        %v335 = vunpack.c.l.b16 %v232
        %v336 = vunpack.c.h.b16 %v232
        %v337 = vunpack.c.l.b16 %v233
        %v338 = vunpack.c.h.b16 %v233
        %v339 = vpack.c.b16 %v295, %v293
        %v340 = vpack.c.b16 %v296, %v294
        %v341 = vpack.c.b16 %v299, %v297
        %v342 = vpack.c.b16 %v300, %v298
        %v343 = vpack.c.b16 %v303, %v301
        %v344 = vpack.c.b16 %v304, %v302
        %v345 = vpack.c.b16 %v307, %v305
        %v346 = vpack.c.b16 %v308, %v306
        %v347 = vpack.c.b16 %v311, %v309
        %v348 = vpack.c.b16 %v312, %v310
        %v349 = vpack.c.b16 %v315, %v313
        %v350 = vpack.c.b16 %v316, %v314
        %v351 = vpack.c.b16 %v319, %v317
        %v352 = vpack.c.b16 %v320, %v318
        %v353 = vpack.c.b16 %v323, %v321
        %v354 = vpack.c.b16 %v324, %v322
        %v355 = vpack.c.b16 %v327, %v325
        %v356 = vpack.c.b16 %v328, %v326
        %v357 = vpack.c.b16 %v331, %v329
        %v358 = vpack.c.b16 %v332, %v330
        %v359 = vpack.c.b16 %v335, %v333
        %v360 = vpack.c.b16 %v336, %v334
        %v361 = vpack.c.b16 %v337, %v337
        %v362 = vpack.c.b16 %v338, %v338
        %vm385 = vcmask 424960
        %v387 = vsel %vm385, %v259, 0
        %v390 = vsel %vm385, %v261, 0
        %v393 = vsel %vm385, %v263, 0
        %v396 = vsel %vm385, %v265, 0
        %vm398 = vcmask 1041408
        %v400 = vsel %vm398, %v361, 0
        %v403 = vsel %vm398, %v362, 0
        %405 = vmatprep.subr.bf16.mxu0 %v340
        %406 = vmatpush1.bf16.msra.mxu0 %v339
        %407 = vmatprep.subr.bf16.mxu0 %v342
        %408 = vmatpush1.bf16.msra.mxu0 %v341
        %409 = vmatprep.subr.bf16.mxu0 %v344
        %410 = vmatpush1.bf16.msra.mxu0 %v343
        %411 = vmatprep.subr.bf16.mxu0 %v346
        %412 = vmatpush1.bf16.msra.mxu0 %v345
        %413 = vmatprep.subr.bf16.mxu0 %v348
        %414 = vmatpush1.bf16.msra.mxu0 %v347
        %415 = vmatprep.subr.bf16.mxu0 %v350
        %416 = vmatpush1.bf16.msra.mxu0 %v349
        %417 = vmatprep.subr.bf16.mxu0 %v352
        %418 = vmatpush1.bf16.msra.mxu0 %v351
        %419 = vmatprep.subr.bf16.mxu0 %v354
        %420 = vmatpush1.bf16.msra.mxu0 %v353
        %421 = vmatprep.subr.bf16.mxu0 %v356
        %422 = vmatpush1.bf16.msra.mxu0 %v355
        %423 = vmatprep.subr.bf16.mxu0 %v358
        %424 = vmatpush1.bf16.msra.mxu0 %v357
        %425 = vmatprep.subr.bf16.mxu0 %v360
        %426 = vmatpush1.bf16.msra.mxu0 %v359
        %427 = vmatprep.subr.bf16.mxu0 %v403
        %428 = vmatpush1.bf16.msra.mxu0 %v400
        %429 = vmatprep.subr.bf16.mxu0 0
        %430 = vmatpush1.bf16.msra.mxu0 0
        %431 = vmatprep.subr.bf16.mxu0 0
        %432 = vmatpush1.bf16.msra.mxu0 0
        %433 = vmatprep.subr.bf16.mxu0 0
        %434 = vmatpush1.bf16.msra.mxu0 0
        %435 = vmatprep.subr.bf16.mxu0 0
        %436 = vmatpush1.bf16.msra.mxu0 0
        %437 = vmatprep.mubr.bf16.mxu0 %v387
        %438 = vmatmul.mubr.bf16.gmra.mrb[0].mxu0 %v258
        %v439 = vpop.f32.mrb[0].mxu0
        %v440 = vadd.f32 0.0, %v439
        %v441 = vpop.f32.mrb[0].mxu0
        %v442 = vadd.f32 0.0, %v441
        %v443 = vpop.f32.mrb[0].mxu0
        %v444 = vadd.f32 0.0, %v443
        %v445 = vpop.f32.mrb[0].mxu0
        %v446 = vadd.f32 0.0, %v445
        %447 = vmatprep.mubr.bf16.mxu0 %v390
        %448 = vmatmul.mubr.bf16.gmra.mrb[0].mxu0 %v260
        %v449 = vpop.f32.mrb[0].mxu0
        %v450 = vadd.f32 0.0, %v449
        %v451 = vpop.f32.mrb[0].mxu0
        %v452 = vadd.f32 0.0, %v451
        %v453 = vpop.f32.mrb[0].mxu0
        %v454 = vadd.f32 0.0, %v453
        %v455 = vpop.f32.mrb[0].mxu0
        %v456 = vadd.f32 0.0, %v455
        %457 = vmatprep.mubr.bf16.mxu0 %v393
        %458 = vmatmul.mubr.bf16.gmra.mrb[0].mxu0 %v262
        %v459 = vpop.f32.mrb[0].mxu0
        %v460 = vadd.f32 0.0, %v459
        %v461 = vpop.f32.mrb[0].mxu0
        %v462 = vadd.f32 0.0, %v461
        %v463 = vpop.f32.mrb[0].mxu0
        %v464 = vadd.f32 0.0, %v463
        %v465 = vpop.f32.mrb[0].mxu0
        %v466 = vadd.f32 0.0, %v465
        %467 = vmatprep.mubr.bf16.mxu0 %v396
        %468 = vmatmul.mubr.bf16.gmra.mrb[0].mxu0 %v264
        %v469 = vpop.f32.mrb[0].mxu0
        %v470 = vadd.f32 0.0, %v469
        %v471 = vpop.f32.mrb[0].mxu0
        %v472 = vadd.f32 0.0, %v471
        %v473 = vpop.f32.mrb[0].mxu0
        %v474 = vadd.f32 0.0, %v473
        %v475 = vpop.f32.mrb[0].mxu0
        %v476 = vadd.f32 0.0, %v475
        %477 = vdwg.mxu0
        %v478 = vld [vmem:[%s2] sm:$0x3]
        %v480 = vlaneseq
        %v481 = vshrl.u32 %v480, 7
        %v482 = vsub.s32 0, %v481
        %v483 = vrot.slane %v478, %v482
        %v484 = vlaneseq
        %v485 = vshrl.u32 %v484, 7
        %v486 = vsub.s32 1, %v485
        %v487 = vrot.slane %v478, %v486
        %v490 = vmul.f32 %v440, %v483
        %v491 = vmul.f32 %v442, %v487
        %v492 = vmul.f32 %v444, %v483
        %v493 = vmul.f32 %v446, %v487
        %v494 = vmul.f32 %v450, %v483
        %v495 = vmul.f32 %v452, %v487
        %v496 = vmul.f32 %v454, %v483
        %v497 = vmul.f32 %v456, %v487
        %v498 = vmul.f32 %v460, %v483
        %v499 = vmul.f32 %v462, %v487
        %v500 = vmul.f32 %v464, %v483
        %v501 = vmul.f32 %v466, %v487
        %v502 = vmul.f32 %v470, %v483
        %v503 = vmul.f32 %v472, %v487
        %v504 = vmul.f32 %v474, %v483
        %v505 = vmul.f32 %v476, %v487
        %v506 = vld [vmem:[%s3] sm:$0x3]
        %v508 = vlaneseq
        %v509 = vshrl.u32 %v508, 7
        %v510 = vsub.s32 0, %v509
        %v511 = vrot.slane %v506, %v510
        %v512 = vlaneseq
        %v513 = vshrl.u32 %v512, 7
        %v514 = vsub.s32 1, %v513
        %v515 = vrot.slane %v506, %v514
        %v518 = vadd.f32 %v490, %v511
        %v519 = vadd.f32 %v491, %v515
        %v520 = vadd.f32 %v492, %v511
        %v521 = vadd.f32 %v493, %v515
        %v522 = vadd.f32 %v494, %v511
        %v523 = vadd.f32 %v495, %v515
        %v524 = vadd.f32 %v496, %v511
        %v525 = vadd.f32 %v497, %v515
        %v526 = vadd.f32 %v498, %v511
        %v527 = vadd.f32 %v499, %v515
        %v528 = vadd.f32 %v500, %v511
        %v529 = vadd.f32 %v501, %v515
        %v530 = vadd.f32 %v502, %v511
        %v531 = vadd.f32 %v503, %v515
        %v532 = vadd.f32 %v504, %v511
        %v533 = vadd.f32 %v505, %v515
        %v534 = vmax.f32 %v518, 0.0
        %v535 = vmax.f32 %v519, 0.0
        %v536 = vmax.f32 %v520, 0.0
        %v537 = vmax.f32 %v521, 0.0
        %v538 = vmax.f32 %v522, 0.0
        %v539 = vmax.f32 %v523, 0.0
        %v540 = vmax.f32 %v524, 0.0
        %v541 = vmax.f32 %v525, 0.0
        %v542 = vmax.f32 %v526, 0.0
        %v543 = vmax.f32 %v527, 0.0
        %v544 = vmax.f32 %v528, 0.0
        %v545 = vmax.f32 %v529, 0.0
        %v546 = vmax.f32 %v530, 0.0
        %v547 = vmax.f32 %v531, 0.0
        %v548 = vmax.f32 %v532, 0.0
        %v549 = vmax.f32 %v533, 0.0
        %v550 = vpack.c.bf16 %v536, %v534
        %v551 = vpack.c.bf16 %v537, %v535
        %v552 = vpack.c.bf16 %v540, %v538
        %v553 = vpack.c.bf16 %v541, %v539
        %v554 = vpack.c.bf16 %v544, %v542
        %v555 = vpack.c.bf16 %v545, %v543
        %v556 = vpack.c.bf16 %v548, %v546
        %v557 = vpack.c.bf16 %v549, %v547
        %v566 = vunpack.c.l.b16 %v550
        %v567 = vunpack.c.l.b16 %v551
        %v568 = vunpack.c.h.b16 %v550
        %v569 = vunpack.c.h.b16 %v551
        %v570 = vunpack.c.l.b16 %v552
        %v571 = vunpack.c.l.b16 %v553
        %v572 = vunpack.c.h.b16 %v552
        %v573 = vunpack.c.h.b16 %v553
        %v574 = vunpack.c.l.b16 %v554
        %v575 = vunpack.c.l.b16 %v555
        %v576 = vunpack.c.h.b16 %v554
        %v577 = vunpack.c.h.b16 %v555
        %v578 = vunpack.c.l.b16 %v556
        %v579 = vunpack.c.l.b16 %v557
        %v580 = vunpack.c.h.b16 %v556
        %v581 = vunpack.c.h.b16 %v557
        %v582 = vpack.c.b16 %v567, %v566
        %v583 = vpack.c.b16 %v569, %v568
        %v584 = vpack.c.b16 %v571, %v570
        %v585 = vpack.c.b16 %v573, %v572
        %v586 = vpack.c.b16 %v575, %v574
        %v587 = vpack.c.b16 %v577, %v576
        %v588 = vpack.c.b16 %v579, %v578
        %v589 = vpack.c.b16 %v581, %v580
        %598 = vst [vmem:[%s193] sm:$0xff] %v582
        %599 = vst [vmem:[%s193 + $0x8] sm:$0xff] %v583
        %600 = vst [vmem:[%s193 + $0x10] sm:$0xff] %v584
        %601 = vst [vmem:[%s193 + $0x18] sm:$0xff] %v585
        %602 = vst [vmem:[%s193 + $0x20] sm:$0xff] %v586
        %603 = vst [vmem:[%s193 + $0x28] sm:$0xff] %v587
        %604 = vst [vmem:[%s193 + $0x30] sm:$0xff] %v588
        %605 = vst [vmem:[%s193 + $0x38] sm:$0xff] %v589
        %s606 = sand.u32 %s115, 1
        %s607 = scalar_lea.sflag [#allocation3], %s606
        %s608 = sand.u32 %s115, 1
        %s609 = smul.addr %s608, 64
        %s610 = scalar_lea.vmem [#allocation2], %s609
        // Predicated region
        $region37: #{_lambda_.3} parent=35 // pred_check
          %p611 = pneg %p125
        $region38: #{_lambda_.3} parent=35 // pred_check_branch
          %613 = sbr.rel (%p611) target = $region40
        $region39: #{_lambda_.3} parent=35 // pred_region
          %s614 = smul.u32 8, %s18
          %s616 = ssub.s32 1024, 1024
          %617 = vsyncadd %s607, %s616
          %s618 = smul.addr %s614, 2
          %s619 = smul.addr %s618, 64
          %s620 = scalar_lea.hbm %s4, %s619
          %s621 = sshll.u32 %s610, 4
          %s622 = int_to_ptr.vmem [resolvable:$true] %s621
          %627 = dma.vmem_to_hbm [thread:$0]  %s622, 1024, %s620, %s607, 128, 128, 8
        $region40: #{_lambda_.3} parent=35 // pred_fallthru
          _
      $region36: #{_lambda_.3} parent=5 // pred_fallthru
        _
      %p628 = scmp.le.s32.totalorder 2, %s13
      // Predicated region
      $region41: #{_lambda_.3} parent=5 // pred_check
        %p629 = pneg %p628
      $region42: #{_lambda_.3} parent=5 // pred_check_branch
        %631 = sbr.rel (%p629) target = $region44
      $region43: #{_lambda_.3} parent=5 // pred_region
        %s632 = ssub.s32 %s13, 2
        // Predicated region
        $region45: #{_lambda_.3} parent=43 // pred_check
          %p633 = pneg %p131
        $region46: #{_lambda_.3} parent=43 // pred_check_branch
          %635 = sbr.rel (%p633) target = $region48
        $region47: #{_lambda_.3} parent=43 // pred_region
          %s636 = sand.u32 %s116, 1
          %s637 = scalar_lea.sflag [#allocation3], %s636
          %s638 = sand.u32 %s116, 1
          %s639 = smul.addr %s638, 64
          %s640 = scalar_lea.vmem [#allocation2], %s639
          %641 = dma.done %s637, 1024
        $region48: #{_lambda_.3} parent=43 // pred_fallthru
          _
      $region44: #{_lambda_.3} parent=5 // pred_fallthru
        _
    $region6: #{_lambda_.3} parent=1 // loop_footer
      %s17 = sadd.s32 1, %s13
    $region7: #{_lambda_.3} parent=1 // loop_footer_branch
      %12 = sbr.rel target = $region3
    $region8: #{_lambda_.3} parent=1 // loop_exit
      _
    %642 = vsyncpa [#allocation3], 1
    %s643 = scalar_lea.sflag [#allocation3], 1
    %644 = vsyncpa %s643, 1

</llo_original>
